<compile_context>
chip_gen: v5e
topology: v5e:2x2
jax: 0.10.0
libtpu: 0.0.40
codegen_flags: <defaults>
</compile_context>

<pallas_src>
import jax
import jax.numpy as jnp
from jax.experimental import pallas as pl
from jax.experimental.pallas import tpu as pltpu


def _round_up(x, m):
    return (x + m - 1) // m * m


def _vmem_limit_bytes():
    # ~40 MiB on v7x (64 MiB physical per TC), 96 MiB on v5e/v6e (128 MiB).
    cap = 64 * 1024 * 1024
    try:
        cap = int(pltpu.get_tpu_info().vmem_capacity_bytes)
    except Exception:
        pass
    return max(32 * 1024 * 1024, min(cap - 24 * 1024 * 1024, 96 * 1024 * 1024))


_VMEM_LIMIT_BYTES = _vmem_limit_bytes()


def _choose_tiles(n):
    """Pad N only to the 128-lane boundary; pick tm/tk as divisors of n_pad."""
    n_pad = _round_up(max(n, 1), 128)
    # Row tile: largest multiple-of-8 divisor of n_pad, capped at 1024 and at
    # n_pad // 2 so grid axis 0 always has >= 2 "parallel" tiles (v7x megacore).
    tm = 8
    for c in range(min(1024, n_pad // 2), 7, -8):
        if n_pad % c == 0:
            tm = c
            break
    # K tile: largest multiple-of-128 divisor of n_pad (lane-aligned), <= 2048.
    tk = 128
    for c in range(min(2048, n_pad), 127, -128):
        if n_pad % c == 0:
            tk = c
            break
    return n_pad, tm, tk


# --------------------------------------------------------------------------
# Kernels
# --------------------------------------------------------------------------
def _xw_kernel(h_ref, w_ref, o_ref):
    # One row-tile of H times the full (padded) weight matrix; f32 accumulate,
    # bf16 store so the memory-bound A_hat pass streams half the bytes.
    o_ref[...] = jnp.dot(h_ref[...], w_ref[...],
                         preferred_element_type=jnp.float32).astype(o_ref.dtype)


def _make_agg_kernel(activation, num_valid_classes, tk, n_k, xw_resident):
    """A_hat @ XW + b with fused activation, block-sparse reduction over k."""

    def kernel(cols_ref, cnt_ref, a_ref, xw_ref, b_ref, o_ref, acc_ref):
        i = pl.program_id(0)
        k = pl.program_id(1)

        @pl.when(k == 0)
        def _():
            acc_ref[...] = jnp.zeros_like(acc_ref)

        # Skip all-zero A_hat blocks entirely; their DMA is elided because the
        # index_map repeats the previous (already fetched) block column.
        @pl.when(k < cnt_ref[i])
        def _():
            if xw_resident:
                col = cols_ref[i * n_k + k]
                start = pl.multiple_of(col * tk, 128)
                xw_blk = xw_ref[pl.ds(start, tk), :]
            else:
                xw_blk = xw_ref[...]
            acc_ref[...] += jnp.dot(a_ref[...], xw_blk,
                                    preferred_element_type=jnp.float32)

        @pl.when(k == pl.num_programs(1) - 1)
        def _():
            z = acc_ref[...] + b_ref[...]
            if activation == "relu":
                # dropout(training=False) after ReLU -> identity
                o_ref[...] = jnp.maximum(z, 0.0).astype(o_ref.dtype)
            else:  # masked softmax over the valid (unpadded) class columns
                col_ids = jax.lax.broadcasted_iota(jnp.int32, z.shape, 1)
                z = jnp.where(col_ids < num_valid_classes, z, -jnp.inf)
                m = jnp.max(z, axis=1, keepdims=True)
                e = jnp.exp(z - m)
                s = jnp.sum(e, axis=1, keepdims=True)
                o_ref[...] = (e / s).astype(o_ref.dtype)   # exact divide

    return kernel


# --------------------------------------------------------------------------
# pallas_call wrappers
# --------------------------------------------------------------------------
def _linear(h, w, tm):
    n_pad, f_in = h.shape
    f_out = w.shape[1]
    return pl.pallas_call(
        _xw_kernel,
        out_shape=jax.ShapeDtypeStruct((n_pad, f_out), jnp.bfloat16),
        grid_spec=pltpu.PrefetchScalarGridSpec(
            num_scalar_prefetch=0,
            grid=(n_pad // tm,),
            in_specs=[pl.BlockSpec((tm, f_in), lambda i: (i, 0)),
                      pl.BlockSpec((f_in, f_out), lambda i: (0, 0))],
            out_specs=pl.BlockSpec((tm, f_out), lambda i: (i, 0))),
        compiler_params=pltpu.CompilerParams(
            dimension_semantics=("parallel",),
            vmem_limit_bytes=_VMEM_LIMIT_BYTES),
        cost_estimate=pl.CostEstimate(
            flops=2 * n_pad * f_in * f_out,
            transcendentals=0,
            bytes_accessed=2 * (n_pad * f_in + f_in * f_out + n_pad * f_out)),
    )(h, w)


def _aggregate(a_p, cols, cnt, xw, b, tm, tk, activation, num_valid_classes,
               out_dtype):
    n_pad = a_p.shape[0]
    f_out = xw.shape[1]
    n_row, n_k = n_pad // tm, n_pad // tk

    # Hold XW fully resident in VMEM when (double-buffered) it fits with room
    # to spare; otherwise stream (tk, f_out) blocks driven by the same
    # block-sparse column list.
    xw_resident = 2 * n_pad * f_out * 2 <= _VMEM_LIMIT_BYTES // 3

    a_map = lambda i, k, cols_ref, cnt_ref: (i, cols_ref[i * n_k + k])
    if xw_resident:
        xw_spec = pl.BlockSpec((n_pad, f_out),
                               lambda i, k, cols_ref, cnt_ref: (0, 0))
    else:
        xw_spec = pl.BlockSpec(
            (tk, f_out),
            lambda i, k, cols_ref, cnt_ref: (cols_ref[i * n_k + k], 0))

    kernel = _make_agg_kernel(activation, num_valid_classes, tk, n_k,
                              xw_resident)
    out_bytes = 4 if out_dtype == jnp.float32 else 2
    return pl.pallas_call(
        kernel,
        out_shape=jax.ShapeDtypeStruct((n_pad, f_out), out_dtype),
        grid_spec=pltpu.PrefetchScalarGridSpec(
            num_scalar_prefetch=2,
            grid=(n_row, n_k),
            in_specs=[pl.BlockSpec((tm, tk), a_map),
                      xw_spec,
                      pl.BlockSpec((1, f_out),
                                   lambda i, k, cols_ref, cnt_ref: (0, 0))],
            out_specs=pl.BlockSpec((tm, f_out),
                                   lambda i, k, cols_ref, cnt_ref: (i, 0)),
            scratch_shapes=[pltpu.VMEM((tm, f_out), jnp.float32)]),
        compiler_params=pltpu.CompilerParams(
            dimension_semantics=("parallel", "arbitrary"),
            vmem_limit_bytes=_VMEM_LIMIT_BYTES),
        cost_estimate=pl.CostEstimate(
            flops=2 * n_pad * n_pad * f_out,
            transcendentals=(n_pad * f_out if activation == "softmax" else 0),
            bytes_accessed=(2 * n_pad * n_pad      # A_hat blocks (upper bound)
                            + 2 * n_pad * f_out    # XW read once (resident)
                            + 4 * f_out            # bias
                            + out_bytes * n_pad * f_out)),
    )(cols, cnt, a_p, xw, b)


# --------------------------------------------------------------------------
# Graph / parameter preparation (hoisted out of the forward pass)
# --------------------------------------------------------------------------
def build_normalized_adj(edge_index, num_nodes):
    """Dense A_hat = D^{-1/2}(A + I)D^{-1/2}, matching PyG GCNConv gcn_norm."""
    row, col = edge_index[0], edge_index[1]
    loops = jnp.arange(num_nodes, dtype=edge_index.dtype)
    row = jnp.concatenate([row, loops])
    col = jnp.concatenate([col, loops])
    ew = jnp.ones(row.shape[0], dtype=jnp.float32)
    deg = jnp.zeros((num_nodes,), jnp.float32).at[col].add(ew)
    dinv = jnp.where(deg > 0, 1.0 / jnp.sqrt(deg), 0.0)
    norm = dinv[row] * ew * dinv[col]
    a_hat = jnp.zeros((num_nodes, num_nodes), jnp.float32).at[col, row].add(norm)
    return a_hat


def _block_metadata(a_p, tm, tk):
    """Per-row-tile lists of nonzero (tm, tk) block columns for scalar prefetch."""
    n_pad = a_p.shape[0]
    n_row, n_k = n_pad // tm, n_pad // tk
    blk = a_p.reshape(n_row, tm, n_k, tk)
    nz = jnp.any(blk != 0, axis=(1, 3))                          # (n_row, n_k)
    cnt = jnp.sum(nz, axis=1).astype(jnp.int32)                  # (n_row,)
    # Stable sort puts nonzero block columns first, in ascending column order.
    order = jnp.argsort((~nz).astype(jnp.int32), axis=1).astype(jnp.int32)
    # Padding entries repeat the last valid column so the pipeline revisits the
    # same (already fetched) block instead of DMA'ing a new one.
    last = jnp.take_along_axis(order, jnp.maximum(cnt - 1, 0)[:, None], axis=1)
    k_iota = jnp.arange(n_k, dtype=jnp.int32)[None, :]
    cols = jnp.where(k_iota < cnt[:, None], order, last)
    return cols.reshape(-1).astype(jnp.int32), cnt


def prepare_graph(edge_index, num_nodes):
    """Padded bf16 A_hat + block-sparsity metadata, computed once."""
    n_pad, tm, tk = _choose_tiles(num_nodes)
    a_hat = build_normalized_adj(edge_index, num_nodes)
    a_p = jnp.zeros((n_pad, n_pad), jnp.bfloat16)
    a_p = a_p.at[:num_nodes, :num_nodes].set(a_hat.astype(jnp.bfloat16))
    cols, cnt = _block_metadata(a_p, tm, tk)
    return {"a_hat": a_hat, "a_p": a_p, "cols": cols, "cnt": cnt,
            "n": num_nodes, "n_pad": n_pad, "tm": tm, "tk": tk}


def prepare_params(params):
    """Pad/cast weights (bf16) and biases (f32) to 128-lane multiples once."""
    padded = []
    for w, b in params:
        w_in, w_out = w.shape
        w_in_p, w_out_p = _round_up(w_in, 128), _round_up(w_out, 128)
        w_p = jnp.zeros((w_in_p, w_out_p), jnp.bfloat16)
        w_p = w_p.at[:w_in, :w_out].set(w.astype(jnp.bfloat16))
        b_p = jnp.zeros((1, w_out_p), jnp.float32)
        b_p = b_p.at[:, :w_out].set(b.astype(jnp.float32).reshape(1, -1))
        padded.append((w_p, b_p))
    return padded


# --------------------------------------------------------------------------
# Forward pass
# --------------------------------------------------------------------------
def gcn_forward(graph, x, padded_params, num_classes):
    n, n_pad, tm, tk = graph["n"], graph["n_pad"], graph["tm"], graph["tk"]
    f_in = x.shape[1]
    f_in_pad = _round_up(f_in, 128)
    h = jnp.zeros((n_pad, f_in_pad), jnp.bfloat16)
    h = h.at[:n, :f_in].set(x.astype(jnp.bfloat16))

    num_layers = len(padded_params)
    for idx, (w_p, b_p) in enumerate(padded_params):
        xw = _linear(h, w_p, tm)
        last = idx == num_layers - 1
        h = _aggregate(graph["a_p"], graph["cols"], graph["cnt"], xw, b_p,
                       tm, tk,
                       activation="softmax" if last else "relu",
                       num_valid_classes=num_classes,
                       out_dtype=jnp.float32 if last else jnp.bfloat16)
    return h[:n, :num_classes]


# --------------------------------------------------------------------------
# Reference / test
# --------------------------------------------------------------------------
def init_params(key, num_node_features, num_classes, hidden):
    k1, k2, k3 = jax.random.split(key, 3)

    def glorot(k, fan_in, fan_out):
        limit = jnp.sqrt(6.0 / (fan_in + fan_out))
        return jax.random.uniform(k, (fan_in, fan_out), jnp.float32, -limit, limit)

    w1 = glorot(k1, num_node_features, hidden)
    w2 = glorot(k2, hidden, hidden)
    w3 = glorot(k3, hidden, num_classes)
    b1 = jnp.zeros((1, hidden), jnp.float32)
    b2 = jnp.zeros((1, hidden), jnp.float32)
    b3 = jnp.zeros((1, num_classes), jnp.float32)
    return [(w1, b1), (w2, b2), (w3, b3)]


def reference_forward(a_hat, x, params):
    """Pure-JAX reference mirroring the kernel's bf16 inputs / f32 accumulation."""
    a = a_hat.astype(jnp.bfloat16)
    h = x.astype(jnp.bfloat16)
    num_layers = len(params)
    logits = None
    for idx, (w, b) in enumerate(params):
        xw = jnp.dot(h, w.astype(jnp.bfloat16),
                     preferred_element_type=jnp.float32).astype(jnp.bfloat16)
        z = jnp.dot(a, xw, preferred_element_type=jnp.float32) + b
        if idx < num_layers - 1:
            h = jnp.maximum(z, 0.0).astype(jnp.bfloat16)
        else:
            logits = z
    return jax.nn.softmax(logits, axis=1)


if __name__ == "__main__":
    key = jax.random.PRNGKey(0)
    k_x, k_e, k_p = jax.random.split(key, 3)

    num_nodes = 64
    num_node_features = 16
    num_classes = 7
    hidden = 256          # module default
    num_edges = 256

    x = jax.random.normal(k_x, (num_nodes, num_node_features), jnp.float32)
    edge_index = jax.random.randint(k_e, (2, num_edges), 0, num_nodes, jnp.int32)

    graph = prepare_graph(edge_index, num_nodes)
    params = init_params(k_p, num_node_features, num_classes, hidden)
    padded_params = prepare_params(params)

    out = gcn_forward(graph, x, padded_params, num_classes)
    out = jax.block_until_ready(out)

    ref = reference_forward(graph["a_hat"], x, params)
    assert out.shape == (num_nodes, num_classes)
    assert jnp.allclose(out, ref, atol=5e-3, rtol=5e-3)
    assert jnp.allclose(jnp.sum(out, axis=1), 1.0, atol=5e-3)

    print("KERNEL_OK")
</pallas_src>

<mosaic_0001>
module attributes {stable_mosaic.version = 11 : i64} {
  func.func @_xw_kernel(%arg0: i32, %arg1: memref<64x128xbf16, #tpu.memory_space<vmem>>, %arg2: memref<128x256xbf16, #tpu.memory_space<vmem>>, %arg3: memref<64x256xbf16, #tpu.memory_space<vmem>>) attributes {dimension_semantics = [#tpu.dimension_semantics<parallel>], iteration_bounds = array<i64: 2>, scalar_prefetch = 0 : i64, scratch_operands = 0 : i64, tpu.core_type = #tpu.core_type<tc>, window_params = [{transform_indices = @transform_0, window_bounds = array<i64: 64, 128>}, {pipeline_mode = #tpu.pipeline_mode<synchronous>, transform_indices = @transform_1, window_bounds = array<i64: 128, 256>}, {transform_indices = @transform_2, window_bounds = array<i64: 64, 256>}]} {
    %c0 = arith.constant 0 : index
    %c0_0 = arith.constant 0 : index
    %0 = vector.load %arg1[%c0, %c0_0] : memref<64x128xbf16, #tpu.memory_space<vmem>>, vector<64x128xbf16>
    %c0_1 = arith.constant 0 : index
    %c0_2 = arith.constant 0 : index
    %1 = vector.load %arg2[%c0_1, %c0_2] : memref<128x256xbf16, #tpu.memory_space<vmem>>, vector<128x256xbf16>
    %cst = arith.constant dense<0.000000e+00> : vector<64x256xf32>
    %2 = tpu.matmul %0, %1, %cst {dimension_numbers = #tpu.dot_dimension_numbers<[1], [0], [0], [1], [0, 0, 1, 1], [], []>} : vector<64x128xbf16>, vector<128x256xbf16>, vector<64x256xf32> -> vector<64x256xf32>
    %3 = arith.truncf %2 : vector<64x256xf32> to vector<64x256xbf16>
    %c0_3 = arith.constant 0 : index
    %c0_4 = arith.constant 0 : index
    %4 = vector.load %arg3[%c0_3, %c0_4] : memref<64x256xbf16, #tpu.memory_space<vmem>>, vector<64x256xbf16>
    tpu.vector_store %arg3[%c0_3, %c0_4], %3 {strides = array<i32>} : memref<64x256xbf16, #tpu.memory_space<vmem>>, vector<64x256xbf16>,
    return
  }
  func.func @transform_0(%arg0: i32) -> (i32, i32) {
    %c0_i32 = arith.constant 0 : i32
    %c0_i32_0 = arith.constant 0 : i32
    return %arg0, %c0_i32 : i32, i32
  }
  func.func @transform_1(%arg0: i32) -> (i32, i32) {
    %c0_i32 = arith.constant 0 : i32
    %c0_i32_0 = arith.constant 0 : i32
    %c0_i32_1 = arith.constant 0 : i32
    return %c0_i32, %c0_i32_0 : i32, i32
  }
  func.func @transform_2(%arg0: i32) -> (i32, i32) {
    %c0_i32 = arith.constant 0 : i32
    %c0_i32_0 = arith.constant 0 : i32
    return %arg0, %c0_i32 : i32, i32
  }
}

</mosaic_0001>

<llo_original>
// kernel: tpu_custom_call.1
$region0: #{tpu_custom_call.1}
  #allocation0 [shape = 'u32[]', space=smem, size = 0x4, offset = 0x4, fixed_abs, tag = 'smem constant byte address 0x4 - core index']
  #allocation1 [shape = 'u32[72,128]{1,0:T(1,128)}', space=vmem, size = 0x9000, scoped, tag = 'internal scratch']
  %s0 = inlined_call_operand.hbm [shape: bf16[128,128], index: 0, kind: input, shape index: {}]
  %s1 = inlined_call_operand.hbm [shape: bf16[128,256], index: 1, kind: input, shape index: {}]
  %s2 = inlined_call_operand.hbm [shape: bf16[128,256], index: 2, kind: output, shape index: {}]
  %s3 = sld [smem:[#allocation0]]
  $region49: #{tpu_custom_call.1} parent=0
    _
  %s5 = ssub.s32 1, %s3
  %s6 = scalar_select 0, %s5, %s3
  $region1: #{tpu_custom_call.1} parent=0
    #allocation2 [shape = 'u8[32768]{0}', space=vmem, size = 0x8000, scoped, tag = 'input window, operand 0']
    #allocation3 [shape = 's32[2]{0}', space=sflag, size = 0x8, scoped, tag = 'scoped memory for tpu_custom_call.1']
    #allocation4 [shape = 's32[2]{0}', space=sflag, size = 0x8, scoped, tag = 'scoped memory for tpu_custom_call.1']
    #allocation5 [shape = 'u8[65536]{0}', space=vmem, size = 0x10000, scoped, tag = 'input window, operand 1, single buffered']
    #allocation6 [shape = 's32[1]{0}', space=sflag, size = 0x4, scoped, tag = 'scoped memory for tpu_custom_call.1']
    #allocation7 [shape = 'u8[65536]{0}', space=vmem, size = 0x10000, scoped, tag = 'output window, operand 0']
    %7 = vsyncpa [#allocation3], 0
    %s8 = scalar_lea.sflag [#allocation3], 1
    %9 = vsyncpa %s8, 0
    %10 = vsyncpa [#allocation6], 0
    %11 = vsyncpa [#allocation4], 0
    %s12 = scalar_lea.sflag [#allocation4], 1
    %13 = vsyncpa %s12, 0
    loop: start=0, step=1, limit=4
    $region2: #{tpu_custom_call.1} parent=1 // loop_pre_header
      _
    $region3: #{tpu_custom_call.1} parent=1 // loop_header
      %s15 = sphi 0, %s19
      %p16 = scmp.ge.s32.totalorder %s15, 4
      %s25 = sphi 0, %s27
      %s28 = sphi 0, %s25
      %s29 = sphi 0, %s28
      %s45 = sphi 0, %s29
      %s49 = sphi 0, %s49
      %s51 = sphi 0, %s49
      %s52 = sphi 0, %s51
      %s66 = sphi 0, %s52
      %s72 = sphi 0, %s74
      %s75 = sphi 0, %s72
      %s76 = sphi 0, %s75
      %s92 = sphi 0, %s76
    $region4: #{tpu_custom_call.1} parent=1 // loop_header_branch
      %18 = sbr.rel (%p16) target = $region8
    $region5: #{tpu_custom_call.1} parent=1 // loop_body
      %s20 = ssub.s32 %s15, 1
      %s21 = ssub.s32 %s15, 2
      %s22 = sadd.s32 %s15, 1
      %s23 = ssub.s32 %s15, %s22
      %p24 = scmp.eq.s32.totalorder %s23, 0
      %s26 = sadd.s32 %s25, 1
      %s27 = scalar_select %p24, %s25, %s26
      %p30 = pneg %p24
      %p31 = scmp.eq.s32.totalorder %s15, 1
      %p32 = por %p30, %p31
      %p33 = scmp.ne.s32.totalorder %s25, %s28
      %p34 = scmp.eq.s32.totalorder %s15, 0
      %p35 = por %p33, %p34
      %p36 = scmp.ne.s32.totalorder %s25, %s28
      %p37 = scmp.eq.s32.totalorder %s20, 1
      %p38 = por %p36, %p37
      %p39 = scmp.ne.s32.totalorder %s28, %s29
      %p40 = scmp.eq.s32.totalorder %s20, 0
      %p41 = por %p39, %p40
      %p42 = scmp.ne.s32.totalorder %s28, %s29
      %p43 = scmp.eq.s32.totalorder %s21, 1
      %p44 = por %p42, %p43
      %p46 = scmp.ne.s32.totalorder %s29, %s45
      %p47 = scmp.eq.s32.totalorder %s21, 0
      %p48 = por %p46, %p47
      %s50 = sadd.s32 %s49, 1
      %p53 = scmp.eq.s32.totalorder %s15, 1
      %p54 = scmp.ne.s32.totalorder %s49, %s51
      %p55 = scmp.eq.s32.totalorder %s15, 0
      %p56 = por %p54, %p55
      %p57 = scmp.ne.s32.totalorder %s49, %s51
      %p58 = scmp.eq.s32.totalorder %s20, 1
      %p59 = por %p57, %p58
      %p60 = scmp.ne.s32.totalorder %s51, %s52
      %p61 = scmp.eq.s32.totalorder %s20, 0
      %p62 = por %p60, %p61
      %p63 = scmp.ne.s32.totalorder %s51, %s52
      %p64 = scmp.eq.s32.totalorder %s21, 1
      %p65 = por %p63, %p64
      %p67 = scmp.ne.s32.totalorder %s52, %s66
      %p68 = scmp.eq.s32.totalorder %s21, 0
      %p69 = por %p67, %p68
      %s70 = ssub.s32 %s15, %s22
      %p71 = scmp.eq.s32.totalorder %s70, 0
      %s73 = sadd.s32 %s72, 1
      %s74 = scalar_select %p71, %s72, %s73
      %p77 = pneg %p71
      %p78 = scmp.eq.s32.totalorder %s15, 1
      %p79 = por %p77, %p78
      %p80 = scmp.ne.s32.totalorder %s72, %s75
      %p81 = scmp.eq.s32.totalorder %s15, 0
      %p82 = por %p80, %p81
      %p83 = scmp.ne.s32.totalorder %s72, %s75
      %p84 = scmp.eq.s32.totalorder %s20, 1
      %p85 = por %p83, %p84
      %p86 = scmp.ne.s32.totalorder %s75, %s76
      %p87 = scmp.eq.s32.totalorder %s20, 0
      %p88 = por %p86, %p87
      %p89 = scmp.ne.s32.totalorder %s75, %s76
      %p90 = scmp.eq.s32.totalorder %s21, 1
      %p91 = por %p89, %p90
      %p93 = scmp.ne.s32.totalorder %s76, %s92
      %p94 = scmp.eq.s32.totalorder %s21, 0
      %p95 = por %p93, %p94
      %p96 = scmp.le.s32.totalorder 1, %s15
      %p97 = scmp.lt.s32.totalorder %s15, 3
      %p98 = pnand %p96, %p97
      %p99 = pneg %p98
      // Predicated region
      $region9: #{tpu_custom_call.1} parent=5 // pred_check
        _
      $region10: #{tpu_custom_call.1} parent=5 // pred_check_branch
        %101 = sbr.rel (%p98) target = $region12
      $region11: #{tpu_custom_call.1} parent=5 // pred_region
        %s102 = ssub.s32 %s15, 1
        // Predicated region
        $region13: #{tpu_custom_call.1} parent=11 // pred_check
          %p103 = pneg %p62
        $region14: #{tpu_custom_call.1} parent=11 // pred_check_branch
          %105 = sbr.rel (%p103) target = $region16
        $region15: #{tpu_custom_call.1} parent=11 // pred_region
          %107 = vsyncadd [#allocation6], 0
          %s108 = sshll.u32 %s1, 4
          %s109 = int_to_ptr.hbm [resolvable:$true] %s108
          %s110 = sshll.u32 [#allocation5], 4
          %s111 = int_to_ptr.vmem [resolvable:$true] %s110
          %116 = dma.hbm_to_vmem [thread:$0]  %s109, 2048, %s111, [#allocation6], 128, 128, 8
        $region16: #{tpu_custom_call.1} parent=11 // pred_fallthru
          _
      $region12: #{tpu_custom_call.1} parent=5 // pred_fallthru
        _
      %p117 = scmp.lt.s32.totalorder %s15, 2
      // Predicated region
      $region17: #{tpu_custom_call.1} parent=5 // pred_check
        %p118 = pneg %p117
      $region18: #{tpu_custom_call.1} parent=5 // pred_check_branch
        %120 = sbr.rel (%p118) target = $region20
      $region19: #{tpu_custom_call.1} parent=5 // pred_region
        // Predicated region
        $region21: #{tpu_custom_call.1} parent=19 // pred_check
          %p121 = pneg %p35
        $region22: #{tpu_custom_call.1} parent=19 // pred_check_branch
          %123 = sbr.rel (%p121) target = $region24
        $region23: #{tpu_custom_call.1} parent=19 // pred_region
          %s124 = sand.u32 %s25, 1
          %s125 = scalar_lea.sflag [#allocation3], %s124
          %s126 = sand.u32 %s25, 1
          %s127 = smul.addr %s126, 32
          %s128 = scalar_lea.vmem [#allocation2], %s127
          %s129 = smul.u32 8, %s15
          %131 = vsyncadd %s125, 0
          %s132 = smul.addr %s129, 4
          %s133 = scalar_lea.hbm %s0, %s132
          %s134 = sshll.u32 %s133, 4
          %s135 = int_to_ptr.hbm [resolvable:$true] %s134
          %s136 = sshll.u32 %s128, 4
          %s137 = int_to_ptr.vmem [resolvable:$true] %s136
          %142 = dma.hbm_to_vmem [thread:$0]  %s135, 512, %s137, %s125, 64, 64, 4
        $region24: #{tpu_custom_call.1} parent=19 // pred_fallthru
          _
      $region20: #{tpu_custom_call.1} parent=5 // pred_fallthru
        _
      %p143 = scmp.le.s32.totalorder 1, %s15
      %p144 = scmp.lt.s32.totalorder %s15, 3
      %p145 = pnand %p143, %p144
      %p146 = pneg %p145
      // Predicated region
      $region25: #{tpu_custom_call.1} parent=5 // pred_check
        _
      $region26: #{tpu_custom_call.1} parent=5 // pred_check_branch
        %148 = sbr.rel (%p145) target = $region28
      $region27: #{tpu_custom_call.1} parent=5 // pred_region
        %s149 = ssub.s32 %s15, 1
        %s150 = sand.u32 %s28, 1
        %s151 = scalar_lea.sflag [#allocation3], %s150
        %s152 = sand.u32 %s28, 1
        %s153 = smul.addr %s152, 32
        %s154 = scalar_lea.vmem [#allocation2], %s153
        // Predicated region
        $region29: #{tpu_custom_call.1} parent=27 // pred_check
          %p155 = pneg %p41
        $region30: #{tpu_custom_call.1} parent=27 // pred_check_branch
          %157 = sbr.rel (%p155) target = $region32
        $region31: #{tpu_custom_call.1} parent=27 // pred_region
          %159 = dma.done %s151, 512
        $region32: #{tpu_custom_call.1} parent=27 // pred_fallthru
          _
        // Predicated region
        $region33: #{tpu_custom_call.1} parent=27 // pred_check
          %p160 = pneg %p62
        $region34: #{tpu_custom_call.1} parent=27 // pred_check_branch
          %162 = sbr.rel (%p160) target = $region36
        $region35: #{tpu_custom_call.1} parent=27 // pred_region
          %164 = dma.done [#allocation6], 2048
        $region36: #{tpu_custom_call.1} parent=27 // pred_fallthru
          _
        %s165 = sand.u32 %s28, 1
        %s166 = scalar_lea.sflag [#allocation3], %s165
        %s167 = sand.u32 %s28, 1
        %s168 = smul.addr %s167, 32
        %s169 = scalar_lea.vmem [#allocation2], %s168
        %p170 = pneg %p41
        %p171 = pneg %p38
        %p172 = pneg %p62
        %p173 = pneg %p59
        %p174 = pneg %p88
        %p175 = pneg %p85
        %s176 = sand.u32 %s75, 1
        %s177 = scalar_lea.sflag [#allocation4], %s176
        %s178 = sand.u32 %s75, 1
        %s179 = smul.addr %s178, 64
        %s180 = scalar_lea.vmem [#allocation7], %s179
        %s181 = smul.u32 8, %s20
        %s182 = smul.u32 8, %s20
        %v183 = vld [vmem:[%s154] sm:$0xf]
        %v184 = vld [vmem:[%s154 + $0x4] sm:$0xf]
        %v185 = vld [vmem:[%s154 + $0x8] sm:$0xf]
        %v186 = vld [vmem:[%s154 + $0xc] sm:$0xf]
        %v187 = vld [vmem:[%s154 + $0x10] sm:$0xf]
        %v188 = vld [vmem:[%s154 + $0x14] sm:$0xf]
        %v189 = vld [vmem:[%s154 + $0x18] sm:$0xf]
        %v190 = vld [vmem:[%s154 + $0x1c] sm:$0xf]
        %v191 = vld [vmem:[#allocation5] sm:$0xff]
        %v192 = vld [vmem:[#allocation5 + $0x8] sm:$0xff]
        %v193 = vld [vmem:[#allocation5 + $0x10] sm:$0xff]
        %v194 = vld [vmem:[#allocation5 + $0x18] sm:$0xff]
        %v195 = vld [vmem:[#allocation5 + $0x20] sm:$0xff]
        %v196 = vld [vmem:[#allocation5 + $0x28] sm:$0xff]
        %v197 = vld [vmem:[#allocation5 + $0x30] sm:$0xff]
        %v198 = vld [vmem:[#allocation5 + $0x38] sm:$0xff]
        %v199 = vld [vmem:[#allocation5 + $0x40] sm:$0xff]
        %v200 = vld [vmem:[#allocation5 + $0x48] sm:$0xff]
        %v201 = vld [vmem:[#allocation5 + $0x50] sm:$0xff]
        %v202 = vld [vmem:[#allocation5 + $0x58] sm:$0xff]
        %v203 = vld [vmem:[#allocation5 + $0x60] sm:$0xff]
        %v204 = vld [vmem:[#allocation5 + $0x68] sm:$0xff]
        %v205 = vld [vmem:[#allocation5 + $0x70] sm:$0xff]
        %v206 = vld [vmem:[#allocation5 + $0x78] sm:$0xff]
        %v215 = vunpack.c.l.b16 %v183
        %v216 = vunpack.c.l.b16 %v184
        %v217 = vunpack.c.l.b16 %v185
        %v218 = vunpack.c.l.b16 %v186
        %v219 = vunpack.c.l.b16 %v187
        %v220 = vunpack.c.l.b16 %v188
        %v221 = vunpack.c.l.b16 %v189
        %v222 = vunpack.c.l.b16 %v190
        %v223 = vpack.c.b16 %v216, %v215
        %v224 = vpack.c.b16 %v218, %v217
        %v225 = vpack.c.b16 %v220, %v219
        %v226 = vpack.c.b16 %v222, %v221
        %v247 = vunpack.c.l.b16 %v191
        %v248 = vunpack.c.h.b16 %v191
        %v249 = vunpack.c.l.b16 %v192
        %v250 = vunpack.c.h.b16 %v192
        %v251 = vunpack.c.l.b16 %v193
        %v252 = vunpack.c.h.b16 %v193
        %v253 = vunpack.c.l.b16 %v194
        %v254 = vunpack.c.h.b16 %v194
        %v255 = vunpack.c.l.b16 %v195
        %v256 = vunpack.c.h.b16 %v195
        %v257 = vunpack.c.l.b16 %v196
        %v258 = vunpack.c.h.b16 %v196
        %v259 = vunpack.c.l.b16 %v197
        %v260 = vunpack.c.h.b16 %v197
        %v261 = vunpack.c.l.b16 %v198
        %v262 = vunpack.c.h.b16 %v198
        %v263 = vunpack.c.l.b16 %v199
        %v264 = vunpack.c.h.b16 %v199
        %v265 = vunpack.c.l.b16 %v200
        %v266 = vunpack.c.h.b16 %v200
        %v267 = vunpack.c.l.b16 %v201
        %v268 = vunpack.c.h.b16 %v201
        %v269 = vunpack.c.l.b16 %v202
        %v270 = vunpack.c.h.b16 %v202
        %v271 = vunpack.c.l.b16 %v203
        %v272 = vunpack.c.h.b16 %v203
        %v273 = vunpack.c.l.b16 %v204
        %v274 = vunpack.c.h.b16 %v204
        %v275 = vunpack.c.l.b16 %v205
        %v276 = vunpack.c.h.b16 %v205
        %v277 = vunpack.c.l.b16 %v206
        %v278 = vunpack.c.h.b16 %v206
        %v279 = vpack.c.b16 %v249, %v247
        %v280 = vpack.c.b16 %v250, %v248
        %v281 = vpack.c.b16 %v253, %v251
        %v282 = vpack.c.b16 %v254, %v252
        %v283 = vpack.c.b16 %v257, %v255
        %v284 = vpack.c.b16 %v258, %v256
        %v285 = vpack.c.b16 %v261, %v259
        %v286 = vpack.c.b16 %v262, %v260
        %v287 = vpack.c.b16 %v265, %v263
        %v288 = vpack.c.b16 %v266, %v264
        %v289 = vpack.c.b16 %v269, %v267
        %v290 = vpack.c.b16 %v270, %v268
        %v291 = vpack.c.b16 %v273, %v271
        %v292 = vpack.c.b16 %v274, %v272
        %v293 = vpack.c.b16 %v277, %v275
        %v294 = vpack.c.b16 %v278, %v276
        %311 = vmatpush.bf16.msra.mxu0 %v293
        %312 = vmatpush.bf16.msra.mxu0 %v291
        %313 = vmatpush.bf16.msra.mxu0 %v289
        %314 = vmatpush.bf16.msra.mxu0 %v287
        %315 = vmatpush.bf16.msra.mxu0 %v285
        %316 = vmatpush.bf16.msra.mxu0 %v283
        %317 = vmatpush.bf16.msra.mxu0 %v281
        %318 = vmatpush.bf16.msra.mxu0 %v279
        %319 = vmatmul.bf16.gmra.mxu0 %v223
        %v320 = vpop.f32.mrf.mxu0
        %v321 = vadd.f32 0.0, %v320
        %v322 = vpop.f32.mrf.mxu0
        %v323 = vadd.f32 0.0, %v322
        %324 = vmatmul.bf16.gmra.mxu0 %v224
        %v325 = vpop.f32.mrf.mxu0
        %v326 = vadd.f32 0.0, %v325
        %v327 = vpop.f32.mrf.mxu0
        %v328 = vadd.f32 0.0, %v327
        %329 = vmatmul.bf16.gmra.mxu0 %v225
        %v330 = vpop.f32.mrf.mxu0
        %v331 = vadd.f32 0.0, %v330
        %v332 = vpop.f32.mrf.mxu0
        %v333 = vadd.f32 0.0, %v332
        %334 = vmatmul.bf16.gmra.mxu0 %v226
        %v335 = vpop.f32.mrf.mxu0
        %v336 = vadd.f32 0.0, %v335
        %v337 = vpop.f32.mrf.mxu0
        %v338 = vadd.f32 0.0, %v337
        %339 = vdwg.mxu0
        %340 = vmatpush.bf16.msra.mxu0 %v294
        %341 = vmatpush.bf16.msra.mxu0 %v292
        %342 = vmatpush.bf16.msra.mxu0 %v290
        %343 = vmatpush.bf16.msra.mxu0 %v288
        %344 = vmatpush.bf16.msra.mxu0 %v286
        %345 = vmatpush.bf16.msra.mxu0 %v284
        %346 = vmatpush.bf16.msra.mxu0 %v282
        %347 = vmatpush.bf16.msra.mxu0 %v280
        %348 = vmatmul.bf16.gmra.mxu0 %v223
        %v349 = vpop.f32.mrf.mxu0
        %v350 = vadd.f32 0.0, %v349
        %v351 = vpop.f32.mrf.mxu0
        %v352 = vadd.f32 0.0, %v351
        %353 = vmatmul.bf16.gmra.mxu0 %v224
        %v354 = vpop.f32.mrf.mxu0
        %v355 = vadd.f32 0.0, %v354
        %v356 = vpop.f32.mrf.mxu0
        %v357 = vadd.f32 0.0, %v356
        %358 = vmatmul.bf16.gmra.mxu0 %v225
        %v359 = vpop.f32.mrf.mxu0
        %v360 = vadd.f32 0.0, %v359
        %v361 = vpop.f32.mrf.mxu0
        %v362 = vadd.f32 0.0, %v361
        %363 = vmatmul.bf16.gmra.mxu0 %v226
        %v364 = vpop.f32.mrf.mxu0
        %v365 = vadd.f32 0.0, %v364
        %v366 = vpop.f32.mrf.mxu0
        %v367 = vadd.f32 0.0, %v366
        %368 = vdwg.mxu0
        %v369 = vpack.c.bf16 %v350, %v321
        %v370 = vpack.c.bf16 %v352, %v323
        %v371 = vpack.c.bf16 %v355, %v326
        %v372 = vpack.c.bf16 %v357, %v328
        %v373 = vpack.c.bf16 %v360, %v331
        %v374 = vpack.c.bf16 %v362, %v333
        %v375 = vpack.c.bf16 %v365, %v336
        %v376 = vpack.c.bf16 %v367, %v338
        %377 = vst [vmem:[%s180] sm:$0xff] %v369
        %378 = vst [vmem:[%s180 + $0x8] sm:$0xff] %v370
        %379 = vst [vmem:[%s180 + $0x10] sm:$0xff] %v371
        %380 = vst [vmem:[%s180 + $0x18] sm:$0xff] %v372
        %381 = vst [vmem:[%s180 + $0x20] sm:$0xff] %v373
        %382 = vst [vmem:[%s180 + $0x28] sm:$0xff] %v374
        %383 = vst [vmem:[%s180 + $0x30] sm:$0xff] %v375
        %384 = vst [vmem:[%s180 + $0x38] sm:$0xff] %v376
        %s385 = sand.u32 %s75, 1
        %s386 = scalar_lea.sflag [#allocation4], %s385
        %s387 = sand.u32 %s75, 1
        %s388 = smul.addr %s387, 64
        %s389 = scalar_lea.vmem [#allocation7], %s388
        // Predicated region
        $region37: #{tpu_custom_call.1} parent=27 // pred_check
          %p390 = pneg %p85
        $region38: #{tpu_custom_call.1} parent=27 // pred_check_branch
          %392 = sbr.rel (%p390) target = $region40
        $region39: #{tpu_custom_call.1} parent=27 // pred_region
          %s393 = smul.u32 8, %s20
          %395 = vsyncadd %s386, 0
          %s396 = smul.addr %s393, 2
          %s397 = smul.addr %s396, 4
          %s398 = scalar_lea.hbm %s2, %s397
          %s399 = sshll.u32 %s389, 4
          %s400 = int_to_ptr.vmem [resolvable:$true] %s399
          %s401 = sshll.u32 %s398, 4
          %s402 = int_to_ptr.hbm [resolvable:$true] %s401
          %407 = dma.vmem_to_hbm [thread:$0]  %s400, 1024, %s402, %s386, 128, 128, 8
        $region40: #{tpu_custom_call.1} parent=27 // pred_fallthru
          _
      $region28: #{tpu_custom_call.1} parent=5 // pred_fallthru
        _
      %p408 = scmp.le.s32.totalorder 2, %s15
      // Predicated region
      $region41: #{tpu_custom_call.1} parent=5 // pred_check
        %p409 = pneg %p408
      $region42: #{tpu_custom_call.1} parent=5 // pred_check_branch
        %411 = sbr.rel (%p409) target = $region44
      $region43: #{tpu_custom_call.1} parent=5 // pred_region
        %s412 = ssub.s32 %s15, 2
        // Predicated region
        $region45: #{tpu_custom_call.1} parent=43 // pred_check
          %p413 = pneg %p91
        $region46: #{tpu_custom_call.1} parent=43 // pred_check_branch
          %415 = sbr.rel (%p413) target = $region48
        $region47: #{tpu_custom_call.1} parent=43 // pred_region
          %s416 = sand.u32 %s76, 1
          %s417 = scalar_lea.sflag [#allocation4], %s416
          %s418 = sand.u32 %s76, 1
          %s419 = smul.addr %s418, 64
          %s420 = scalar_lea.vmem [#allocation7], %s419
          %422 = dma.done %s417, 1024
        $region48: #{tpu_custom_call.1} parent=43 // pred_fallthru
          _
      $region44: #{tpu_custom_call.1} parent=5 // pred_fallthru
        _
    $region6: #{tpu_custom_call.1} parent=1 // loop_footer
      %s19 = sadd.s32 1, %s15
    $region7: #{tpu_custom_call.1} parent=1 // loop_footer_branch
      %14 = sbr.rel target = $region3
    $region8: #{tpu_custom_call.1} parent=1 // loop_exit
      _
    %423 = vsyncpa [#allocation3], 1
    %s424 = scalar_lea.sflag [#allocation3], 1
    %425 = vsyncpa %s424, 1
    %426 = vsyncpa [#allocation6], 1
    %427 = vsyncpa [#allocation4], 1
    %s428 = scalar_lea.sflag [#allocation4], 1
    %429 = vsyncpa %s428, 1

</llo_original>
